<compile_context>
chip_gen: v6e
topology: v6e:2x2x1
jax: 0.10.0
libtpu: 0.0.40
codegen_flags: <defaults>
</compile_context>

<pallas_src>
import functools

import jax
import jax.numpy as jnp
import numpy as np
from jax.experimental import pallas as pl
from jax.experimental.pallas import tpu as pltpu

_LANES = 128


def _round_up(x, m):
    return ((x + m - 1) // m) * m


def _cdiv(a, b):
    return -(-a // b)


def _choose_batch_tiling(B, tile_b):
    """Batch (lane) axis tiling -> (tile_rows, n_steps, padded_B)."""
    tile_b = max(_LANES, _round_up(int(tile_b), _LANES))
    n = max(1, _cdiv(B, tile_b))
    if n == 1:
        # Single whole-batch tile (full-dim block, no 128 constraint, no padding).
        return B, 1, B
    # Even number of steps so the "parallel" batch axis shards evenly across
    # v7x's two TensorCores; each step is a lane-aligned tile of <= tile_b rows.
    n += n % 2
    tile = _round_up(_cdiv(B, n), _LANES)
    return tile, n, n * tile


def _vtn_kernel(xT_ref, w1_ref, b1_ref, wh_ref, bh_ref, epsT_ref, out_ref, *,
                alpha, out_dim):
    # fc1 + bias, f32 accumulation; elementwise kept in f32 (v5e: no bf16 VPU/EUP).
    h = jnp.dot(w1_ref[...], xT_ref[...], preferred_element_type=jnp.float32)
    h = h + b1_ref[...].astype(jnp.float32)
    if 0.0 <= alpha <= 1.0:
        h = jnp.maximum(h, alpha * h)          # LeakyReLU: 1 vmul + 1 vmax
    else:                                      # general alpha fallback
        h = jnp.where(h > 0, h, alpha * h)

    # Fused [mean; logvar] head: one MXU push. Cast back to weight dtype for the MXU
    # (no-op for f32, bf16 input for bf16 weights), accumulate in f32.
    ml = jnp.dot(wh_ref[...], h.astype(wh_ref.dtype),
                 preferred_element_type=jnp.float32)
    ml = ml + bh_ref[...].astype(jnp.float32)
    mean = ml[:out_dim, :]
    logvar = ml[out_dim:, :]

    # Reparameterization: sample = mean + eps * exp(0.5 * logvar)
    sample = mean + epsT_ref[...].astype(jnp.float32) * jnp.exp(0.5 * logvar)

    # Slice stores (no in-kernel concat / relayout). Rows = [mean | logvar | sample].
    out_ref[:2 * out_dim, :] = ml.astype(out_ref.dtype)
    out_ref[2 * out_dim:, :] = sample.astype(out_ref.dtype)


def variational_transition_net(x, params, eps, *, alpha=0.01, tile_b=4096,
                               out_dtype=None):
    """Fused forward pass.

    x: (B, input_dim) or (input_dim,)  (PyTorch: 1-D input is unsqueezed to (1, D)
    and the outputs stay 2-D). Returns (sample, mean, logvar)."""
    if x.ndim < 2:
        x = x[None, :]
    if eps.ndim < 2:
        eps = eps[None, :]

    w1, b1, wh, bh = params                    # PyTorch-layout: (out, in) / (out, 1)
    B, input_dim = x.shape
    hidden_dim = w1.shape[0]
    output_dim = wh.shape[0] // 2
    out_dtype = x.dtype if out_dtype is None else out_dtype

    tile, n_steps, Bp = _choose_batch_tiling(B, tile_b)

    # Feature-major (lane-dense) activations: batch -> 128-lane axis.
    # TODO(synk): callers that keep activations feature-major across transition steps
    # can skip these transposes and pass/receive (D, B) arrays directly.
    xT = x.T
    epsT = eps.T
    if Bp != B:
        xT = jnp.pad(xT, ((0, 0), (0, Bp - B)))
        epsT = jnp.pad(epsT, ((0, 0), (0, Bp - B)))

    kernel = functools.partial(_vtn_kernel, alpha=float(alpha), out_dim=output_dim)

    flops = 2 * Bp * (input_dim * hidden_dim + hidden_dim * 2 * output_dim)
    bytes_accessed = sum(int(a.size) * a.dtype.itemsize
                         for a in (xT, epsT, w1, b1, wh, bh))
    bytes_accessed += int(Bp) * 3 * output_dim * np.dtype(out_dtype).itemsize

    outT = pl.pallas_call(
        kernel,
        out_shape=jax.ShapeDtypeStruct((3 * output_dim, Bp), out_dtype),
        grid_spec=pltpu.PrefetchScalarGridSpec(
            num_scalar_prefetch=0,
            grid=(n_steps,),
            in_specs=[
                pl.BlockSpec((input_dim, tile), lambda i: (0, i)),            # x^T
                pl.BlockSpec((hidden_dim, input_dim), lambda i: (0, 0)),      # W1 (resident)
                pl.BlockSpec((hidden_dim, 1), lambda i: (0, 0)),              # b1 (resident)
                pl.BlockSpec((2 * output_dim, hidden_dim), lambda i: (0, 0)),  # [Wm;Wl]
                pl.BlockSpec((2 * output_dim, 1), lambda i: (0, 0)),           # [bm;bl]
                pl.BlockSpec((output_dim, tile), lambda i: (0, i)),           # eps^T
            ],
            out_specs=pl.BlockSpec((3 * output_dim, tile), lambda i: (0, i)),
        ),
        compiler_params=pltpu.CompilerParams(
            dimension_semantics=("parallel",)),
        cost_estimate=pl.CostEstimate(
            flops=int(flops),
            transcendentals=int(Bp) * output_dim,
            bytes_accessed=int(bytes_accessed)),
    )(xT, w1, b1, wh, bh, epsT)

    outT = outT[:, :B]
    mean = outT[:output_dim].T
    logvar = outT[output_dim:2 * output_dim].T
    sample = outT[2 * output_dim:].T
    return sample, mean, logvar


def init_params(key, input_dim, hidden_dim, output_dim, dtype=jnp.float32):
    """PyTorch-Linear-like U(-1/sqrt(fan_in), +) init in PyTorch weight layout
    (out_features, in_features); head weights/biases pre-fused by stacking rows
    [mean; logvar]."""
    ks = jax.random.split(key, 6)

    def lin(kw, kb, fan_in, fan_out):
        bound = 1.0 / float(np.sqrt(fan_in))
        w = jax.random.uniform(kw, (fan_out, fan_in), jnp.float32, -bound, bound)
        b = jax.random.uniform(kb, (fan_out, 1), jnp.float32, -bound, bound)
        return w, b

    w1, b1 = lin(ks[0], ks[1], input_dim, hidden_dim)
    wm, bm = lin(ks[2], ks[3], hidden_dim, output_dim)
    wl, bl = lin(ks[4], ks[5], hidden_dim, output_dim)
    wh = jnp.concatenate([wm, wl], axis=0)      # (2*out, hidden)
    bh = jnp.concatenate([bm, bl], axis=0)      # (2*out, 1)
    return tuple(a.astype(dtype) for a in (w1, b1, wh, bh))


def _reference(x, params, eps, alpha):
    """Pure-JAX reference of the same math (unfused heads), all in f32."""
    w1, b1, wh, bh = [a.astype(jnp.float32) for a in params]
    out_dim = wh.shape[0] // 2
    h = x.astype(jnp.float32) @ w1.T + b1[:, 0]
    h = jnp.where(h > 0, h, alpha * h)
    ml = h @ wh.T + bh[:, 0]
    mean, logvar = ml[:, :out_dim], ml[:, out_dim:]
    sample = mean + eps.astype(jnp.float32) * jnp.exp(0.5 * logvar)
    return sample, mean, logvar


if __name__ == "__main__":
    # Module config: input_dim = proprioceptive_state_size + action_size
    proprio_size, action_size, h_dim = 8, 4, 32
    alpha = 0.01
    input_dim = proprio_size + action_size
    output_dim = proprio_size

    key = jax.random.PRNGKey(0)
    k_x, k_p, k_e, k_x2, k_e2 = jax.random.split(key, 5)
    params = init_params(k_p, input_dim, h_dim, output_dim)

    # ---- small batch, single whole-batch tile ----
    B = 2
    x = jax.random.normal(k_x, (B, input_dim), jnp.float32)
    eps = jax.random.normal(k_e, (B, output_dim), jnp.float32)
    sample, mean, logvar = variational_transition_net(x, params, eps, alpha=alpha)
    jax.block_until_ready((sample, mean, logvar))

    s_ref, m_ref, lv_ref = _reference(x, params, eps, alpha)
    assert jnp.allclose(mean, m_ref, atol=1e-5)
    assert jnp.allclose(logvar, lv_ref, atol=1e-5)
    assert jnp.allclose(sample, s_ref, atol=1e-5)

    # ---- larger batch forcing a multi-step, even grid (megacore path) ----
    B2 = 300
    x2 = jax.random.normal(k_x2, (B2, input_dim), jnp.float32)
    eps2 = jax.random.normal(k_e2, (B2, output_dim), jnp.float32)
    s2, m2, lv2 = variational_transition_net(x2, params, eps2, alpha=alpha, tile_b=128)
    jax.block_until_ready((s2, m2, lv2))
    s2_ref, m2_ref, lv2_ref = _reference(x2, params, eps2, alpha)
    assert jnp.allclose(m2, m2_ref, atol=1e-5)
    assert jnp.allclose(lv2, lv2_ref, atol=1e-5)
    assert jnp.allclose(s2, s2_ref, atol=1e-5)

    # ---- bf16 storage path (v6e/v7x byte savings; elementwise stays f32 in-kernel) ----
    params_bf = tuple(a.astype(jnp.bfloat16) for a in params)
    s3, m3, lv3 = variational_transition_net(
        x2.astype(jnp.bfloat16), params_bf, eps2.astype(jnp.bfloat16),
        alpha=alpha, tile_b=128)
    jax.block_until_ready((s3, m3, lv3))
    assert jnp.allclose(m3.astype(jnp.float32), m2_ref, atol=1e-1)
    assert jnp.allclose(lv3.astype(jnp.float32), lv2_ref, atol=1e-1)
    assert jnp.allclose(s3.astype(jnp.float32), s2_ref, atol=1e-1)

    # ---- 1-D input path: PyTorch unsqueezes to (1, D) and returns 2-D outputs ----
    s1, m1, lv1 = variational_transition_net(x[0], params, eps[0], alpha=alpha)
    jax.block_until_ready((s1, m1, lv1))
    assert s1.shape == (1, output_dim) and m1.shape == (1, output_dim)
    assert lv1.shape == (1, output_dim)
    assert jnp.allclose(m1[0], m_ref[0], atol=1e-5)
    assert jnp.allclose(s1[0], s_ref[0], atol=1e-5)

    print("KERNEL_OK")
</pallas_src>

<mosaic_0001>
module attributes {stable_mosaic.version = 11 : i64} {
  func.func @_vtn_kernel(%arg0: i32, %arg1: memref<12x2xf32, #tpu.memory_space<vmem>>, %arg2: memref<32x12xf32, #tpu.memory_space<vmem>>, %arg3: memref<32x1xf32, #tpu.memory_space<vmem>>, %arg4: memref<16x32xf32, #tpu.memory_space<vmem>>, %arg5: memref<16x1xf32, #tpu.memory_space<vmem>>, %arg6: memref<8x2xf32, #tpu.memory_space<vmem>>, %arg7: memref<24x2xf32, #tpu.memory_space<vmem>>) attributes {dimension_semantics = [#tpu.dimension_semantics<parallel>], iteration_bounds = array<i64: 1>, scalar_prefetch = 0 : i64, scratch_operands = 0 : i64, tpu.core_type = #tpu.core_type<tc>, window_params = [{transform_indices = @transform_0, window_bounds = array<i64: 12, 2>}, {pipeline_mode = #tpu.pipeline_mode<synchronous>, transform_indices = @transform_1, window_bounds = array<i64: 32, 12>}, {pipeline_mode = #tpu.pipeline_mode<synchronous>, transform_indices = @transform_2, window_bounds = array<i64: 32, 1>}, {pipeline_mode = #tpu.pipeline_mode<synchronous>, transform_indices = @transform_3, window_bounds = array<i64: 16, 32>}, {pipeline_mode = #tpu.pipeline_mode<synchronous>, transform_indices = @transform_4, window_bounds = array<i64: 16, 1>}, {transform_indices = @transform_5, window_bounds = array<i64: 8, 2>}, {transform_indices = @transform_6, window_bounds = array<i64: 24, 2>}]} {
    %c0 = arith.constant 0 : index
    %c0_0 = arith.constant 0 : index
    %0 = vector.load %arg2[%c0, %c0_0] : memref<32x12xf32, #tpu.memory_space<vmem>>, vector<32x12xf32>
    %c0_1 = arith.constant 0 : index
    %c0_2 = arith.constant 0 : index
    %1 = vector.load %arg1[%c0_1, %c0_2] : memref<12x2xf32, #tpu.memory_space<vmem>>, vector<12x2xf32>
    %cst = arith.constant dense<0.000000e+00> : vector<32x2xf32>
    %2 = tpu.matmul %0, %1, %cst {dimension_numbers = #tpu.dot_dimension_numbers<[1], [0], [0], [1], [0, 0, 1, 1], [], []>} : vector<32x12xf32>, vector<12x2xf32>, vector<32x2xf32> -> vector<32x2xf32>
    %c0_3 = arith.constant 0 : index
    %c0_4 = arith.constant 0 : index
    %3 = vector.load %arg3[%c0_3, %c0_4] : memref<32x1xf32, #tpu.memory_space<vmem>>, vector<32x1xf32>
    %4 = vector.broadcast %3 : vector<32x1xf32> to vector<32x2xf32>
    %5 = arith.addf %2, %4 : vector<32x2xf32>
    %cst_5 = arith.constant 0.00999999977 : f32
    %6 = vector.broadcast %cst_5 : f32 to vector<32x2xf32>
    %7 = arith.mulf %6, %5 : vector<32x2xf32>
    %8 = arith.maximumf %5, %7 : vector<32x2xf32>
    %c0_6 = arith.constant 0 : index
    %c0_7 = arith.constant 0 : index
    %9 = vector.load %arg4[%c0_6, %c0_7] : memref<16x32xf32, #tpu.memory_space<vmem>>, vector<16x32xf32>
    %cst_8 = arith.constant dense<0.000000e+00> : vector<16x2xf32>
    %10 = tpu.matmul %9, %8, %cst_8 {dimension_numbers = #tpu.dot_dimension_numbers<[1], [0], [0], [1], [0, 0, 1, 1], [], []>} : vector<16x32xf32>, vector<32x2xf32>, vector<16x2xf32> -> vector<16x2xf32>
    %c0_9 = arith.constant 0 : index
    %c0_10 = arith.constant 0 : index
    %11 = vector.load %arg5[%c0_9, %c0_10] : memref<16x1xf32, #tpu.memory_space<vmem>>, vector<16x1xf32>
    %12 = vector.broadcast %11 : vector<16x1xf32> to vector<16x2xf32>
    %13 = arith.addf %10, %12 : vector<16x2xf32>
    %14 = vector.extract_strided_slice %13 {offsets = [0, 0], sizes = [8, 2], strides = [1, 1]} : vector<16x2xf32> to vector<8x2xf32>
    %15 = vector.extract_strided_slice %13 {offsets = [8, 0], sizes = [8, 2], strides = [1, 1]} : vector<16x2xf32> to vector<8x2xf32>
    %c0_11 = arith.constant 0 : index
    %c0_12 = arith.constant 0 : index
    %16 = vector.load %arg6[%c0_11, %c0_12] : memref<8x2xf32, #tpu.memory_space<vmem>>, vector<8x2xf32>
    %cst_13 = arith.constant 5.000000e-01 : f32
    %17 = vector.broadcast %cst_13 : f32 to vector<8x2xf32>
    %18 = arith.mulf %17, %15 : vector<8x2xf32>
    %19 = math.exp %18 : vector<8x2xf32>
    %20 = arith.mulf %16, %19 : vector<8x2xf32>
    %21 = arith.addf %14, %20 : vector<8x2xf32>
    %c0_14 = arith.constant 0 : index
    %c0_15 = arith.constant 0 : index
    %22 = vector.load %arg7[%c0_14, %c0_15] : memref<24x2xf32, #tpu.memory_space<vmem>>, vector<16x2xf32>
    tpu.vector_store %arg7[%c0_14, %c0_15], %13 {strides = array<i32>} : memref<24x2xf32, #tpu.memory_space<vmem>>, vector<16x2xf32>,
    %c16 = arith.constant 16 : index
    %c0_16 = arith.constant 0 : index
    %23 = vector.load %arg7[%c16, %c0_16] : memref<24x2xf32, #tpu.memory_space<vmem>>, vector<8x2xf32>
    tpu.vector_store %arg7[%c16, %c0_16], %21 {strides = array<i32>} : memref<24x2xf32, #tpu.memory_space<vmem>>, vector<8x2xf32>,
    return
  }
  func.func @transform_0(%arg0: i32) -> (i32, i32) {
    %c0_i32 = arith.constant 0 : i32
    %c0_i32_0 = arith.constant 0 : i32
    return %c0_i32, %arg0 : i32, i32
  }
  func.func @transform_1(%arg0: i32) -> (i32, i32) {
    %c0_i32 = arith.constant 0 : i32
    %c0_i32_0 = arith.constant 0 : i32
    %c0_i32_1 = arith.constant 0 : i32
    return %c0_i32, %c0_i32_0 : i32, i32
  }
  func.func @transform_2(%arg0: i32) -> (i32, i32) {
    %c0_i32 = arith.constant 0 : i32
    %c0_i32_0 = arith.constant 0 : i32
    %c0_i32_1 = arith.constant 0 : i32
    return %c0_i32, %c0_i32_0 : i32, i32
  }
  func.func @transform_3(%arg0: i32) -> (i32, i32) {
    %c0_i32 = arith.constant 0 : i32
    %c0_i32_0 = arith.constant 0 : i32
    %c0_i32_1 = arith.constant 0 : i32
    return %c0_i32, %c0_i32_0 : i32, i32
  }
  func.func @transform_4(%arg0: i32) -> (i32, i32) {
    %c0_i32 = arith.constant 0 : i32
    %c0_i32_0 = arith.constant 0 : i32
    %c0_i32_1 = arith.constant 0 : i32
    return %c0_i32, %c0_i32_0 : i32, i32
  }
  func.func @transform_5(%arg0: i32) -> (i32, i32) {
    %c0_i32 = arith.constant 0 : i32
    %c0_i32_0 = arith.constant 0 : i32
    return %c0_i32, %arg0 : i32, i32
  }
  func.func @transform_6(%arg0: i32) -> (i32, i32) {
    %c0_i32 = arith.constant 0 : i32
    %c0_i32_0 = arith.constant 0 : i32
    return %c0_i32, %arg0 : i32, i32
  }
}

</mosaic_0001>

<llo_original>
// kernel: tpu_custom_call.1
$region0: #{tpu_custom_call.1}
  #allocation0 [shape = 'u32[]', space=smem, size = 0x4, offset = 0x4, fixed_abs, tag = 'smem constant byte address 0x4 - core index']
  #allocation1 [shape = 'u32[144,128]{1,0:T(1,128)}', space=vmem, size = 0x12000, scoped, tag = 'internal scratch']
  %s0 = inlined_call_operand.vmem [shape: f32[12,2], index: 0, kind: input, shape index: {}]
  %s1 = inlined_call_operand.vmem [shape: f32[32,12], index: 1, kind: input, shape index: {}]
  %s2 = inlined_call_operand.vmem [shape: f32[32,1], index: 2, kind: input, shape index: {}]
  %s3 = inlined_call_operand.vmem [shape: f32[16,32], index: 3, kind: input, shape index: {}]
  %s4 = inlined_call_operand.vmem [shape: f32[16,1], index: 4, kind: input, shape index: {}]
  %s5 = inlined_call_operand.vmem [shape: f32[8,2], index: 5, kind: input, shape index: {}]
  %s6 = inlined_call_operand.vmem [shape: f32[24,2], index: 6, kind: output, shape index: {}]
  %s7 = sld [smem:[#allocation0]]
  $region34: #{tpu_custom_call.1} parent=0
    _
  %s9 = ssub.s32 1, %s7
  %s10 = scalar_select 0, %s9, %s7
  // Predicated region
  $region2: #{tpu_custom_call.1} parent=0 // pred_check
    _
  $region3: #{tpu_custom_call.1} parent=0 // pred_check_branch
    %12 = sbr.rel (0) target = $region5
  $region4: #{tpu_custom_call.1} parent=0 // pred_region
    _
  $region5: #{tpu_custom_call.1} parent=0 // pred_fallthru
    _
  // Predicated region
  $region6: #{tpu_custom_call.1} parent=0 // pred_check
    _
  $region7: #{tpu_custom_call.1} parent=0 // pred_check_branch
    %14 = sbr.rel (0) target = $region9
  $region8: #{tpu_custom_call.1} parent=0 // pred_region
    _
  $region9: #{tpu_custom_call.1} parent=0 // pred_fallthru
    _
  // Predicated region
  $region10: #{tpu_custom_call.1} parent=0 // pred_check
    _
  $region11: #{tpu_custom_call.1} parent=0 // pred_check_branch
    %16 = sbr.rel (0) target = $region13
  $region12: #{tpu_custom_call.1} parent=0 // pred_region
    _
  $region13: #{tpu_custom_call.1} parent=0 // pred_fallthru
    _
  // Predicated region
  $region14: #{tpu_custom_call.1} parent=0 // pred_check
    _
  $region15: #{tpu_custom_call.1} parent=0 // pred_check_branch
    %18 = sbr.rel (0) target = $region17
  $region16: #{tpu_custom_call.1} parent=0 // pred_region
    _
  $region17: #{tpu_custom_call.1} parent=0 // pred_fallthru
    _
  // Predicated region
  $region18: #{tpu_custom_call.1} parent=0 // pred_check
    _
  $region19: #{tpu_custom_call.1} parent=0 // pred_check_branch
    %20 = sbr.rel (0) target = $region21
  $region20: #{tpu_custom_call.1} parent=0 // pred_region
    _
  $region21: #{tpu_custom_call.1} parent=0 // pred_fallthru
    _
  // Predicated region
  $region22: #{tpu_custom_call.1} parent=0 // pred_check
    _
  $region23: #{tpu_custom_call.1} parent=0 // pred_check_branch
    %22 = sbr.rel (0) target = $region25
  $region24: #{tpu_custom_call.1} parent=0 // pred_region
    _
  $region25: #{tpu_custom_call.1} parent=0 // pred_fallthru
    _
  %v23 = vld [vmem:[%s1] sm:$0xff]
  %v24 = vld [vmem:[%s1 + $0x8] sm:$0xff]
  %v25 = vld [vmem:[%s1 + $0x10] sm:$0xff]
  %v26 = vld [vmem:[%s1 + $0x18] sm:$0xff]
  %v27 = vld [vmem:[%s0] sm:$0xff]
  %v28 = vld [vmem:[%s0 + $0x8] sm:$0xf]
  %v29 = vld [vmem:[%s2] sm:$0xff]
  %v30 = vld [vmem:[%s2 + $0x8] sm:$0xff]
  %v31 = vld [vmem:[%s2 + $0x10] sm:$0xff]
  %v32 = vld [vmem:[%s2 + $0x18] sm:$0xff]
  %34 = vset.pattern.permute.xlu0 0
  %35 = vperm.xlu0 %34, %v29
  %v36 = vpop.permute.xlu0 %35
  %39 = vset.pattern.permute.xlu0 0
  %40 = vperm.xlu0 %39, %v30
  %v41 = vpop.permute.xlu0 %40
  %44 = vset.pattern.permute.xlu0 0
  %45 = vperm.xlu0 %44, %v31
  %v46 = vpop.permute.xlu0 %45
  %49 = vset.pattern.permute.xlu0 0
  %50 = vperm.xlu0 %49, %v32
  %v51 = vpop.permute.xlu0 %50
  %vm53 = vcmask 97280
  %v55 = vsel %vm53, %v23, 0
  %v58 = vsel %vm53, %v24, 0
  %v61 = vsel %vm53, %v25, 0
  %v64 = vsel %vm53, %v26, 0
  %vm66 = vcmask 1043456
  %v68 = vsel %vm66, %v28, 0
  %70 = vmatprep.subr.mxu0 0.0
  %71 = vmatpush1.msra.mxu0 0.0
  %72 = vmatprep.subr.mxu0 0.0
  %73 = vmatpush1.msra.mxu0 0.0
  %74 = vmatprep.subr.mxu0 0.0
  %75 = vmatpush1.msra.mxu0 0.0
  %76 = vmatprep.subr.mxu0 0.0
  %77 = vmatpush1.msra.mxu0 0.0
  %78 = vmatprep.subr.mxu0 0.0
  %79 = vmatpush1.msra.mxu0 0.0
  %80 = vmatprep.subr.mxu0 0.0
  %81 = vmatpush1.msra.mxu0 0.0
  %82 = vmatprep.subr.mxu0 0.0
  %83 = vmatpush1.msra.mxu0 0.0
  %84 = vmatprep.subr.mxu0 0.0
  %85 = vmatpush1.msra.mxu0 0.0
  %86 = vmatprep.subr.mxu0 0.0
  %87 = vmatpush1.msra.mxu0 0.0
  %88 = vmatprep.subr.mxu0 0.0
  %89 = vmatpush1.msra.mxu0 0.0
  %90 = vmatprep.subr.mxu0 0.0
  %91 = vmatpush1.msra.mxu0 0.0
  %92 = vmatprep.subr.mxu0 0.0
  %93 = vmatpush1.msra.mxu0 0.0
  %94 = vmatprep.subr.mxu0 0.0
  %95 = vmatpush1.msra.mxu0 0.0
  %96 = vmatprep.subr.mxu0 0.0
  %97 = vmatpush1.msra.mxu0 0.0
  %98 = vmatprep.subr.mxu0 0.0
  %99 = vmatpush1.msra.mxu0 %v68
  %100 = vmatprep.subr.mxu0 0.0
  %101 = vmatpush1.msra.mxu0 %v27
  %102 = vmatprep.subr.mxu0 0.0
  %103 = vmatpush2.msra.mxu0 0.0
  %104 = vmatprep.subr.mxu0 0.0
  %105 = vmatpush2.msra.mxu0 0.0
  %106 = vmatprep.subr.mxu0 0.0
  %107 = vmatpush2.msra.mxu0 0.0
  %108 = vmatprep.subr.mxu0 0.0
  %109 = vmatpush2.msra.mxu0 0.0
  %110 = vmatprep.subr.mxu0 0.0
  %111 = vmatpush2.msra.mxu0 0.0
  %112 = vmatprep.subr.mxu0 0.0
  %113 = vmatpush2.msra.mxu0 0.0
  %114 = vmatprep.subr.mxu0 0.0
  %115 = vmatpush2.msra.mxu0 0.0
  %116 = vmatprep.subr.mxu0 0.0
  %117 = vmatpush2.msra.mxu0 0.0
  %118 = vmatprep.subr.mxu0 0.0
  %119 = vmatpush2.msra.mxu0 0.0
  %120 = vmatprep.subr.mxu0 0.0
  %121 = vmatpush2.msra.mxu0 0.0
  %122 = vmatprep.subr.mxu0 0.0
  %123 = vmatpush2.msra.mxu0 0.0
  %124 = vmatprep.subr.mxu0 0.0
  %125 = vmatpush2.msra.mxu0 0.0
  %126 = vmatprep.subr.mxu0 0.0
  %127 = vmatpush2.msra.mxu0 0.0
  %128 = vmatprep.subr.mxu0 0.0
  %129 = vmatpush2.msra.mxu0 0.0
  %130 = vmatprep.subr.mxu0 0.0
  %131 = vmatpush2.msra.mxu0 0.0
  %132 = vmatprep.subr.mxu0 0.0
  %133 = vmatpush2.msra.mxu0 0.0
  %134 = vmatprep.mubr.f32.mxu0 0.0
  %135 = vmatmul.mubr.f32.gmra.mxu0 %v55
  %v136 = vpop.f32.mrf.mxu0
  %v137 = vadd.f32 %v36, %v136
  %v138 = vpop.f32.mrf.mxu0
  %139 = vmatprep.mubr.f32.mxu0 0.0
  %140 = vmatmul.mubr.f32.gmra.mxu0 %v58
  %v141 = vpop.f32.mrf.mxu0
  %v142 = vadd.f32 %v41, %v141
  %v143 = vpop.f32.mrf.mxu0
  %144 = vmatprep.mubr.f32.mxu0 0.0
  %145 = vmatmul.mubr.f32.gmra.mxu0 %v61
  %v146 = vpop.f32.mrf.mxu0
  %v147 = vadd.f32 %v46, %v146
  %v148 = vpop.f32.mrf.mxu0
  %149 = vmatprep.mubr.f32.mxu0 0.0
  %150 = vmatmul.mubr.f32.gmra.mxu0 %v64
  %v151 = vpop.f32.mrf.mxu0
  %v152 = vadd.f32 %v51, %v151
  %v153 = vpop.f32.mrf.mxu0
  %154 = vdwg.mxu0
  %v155 = vmul.f32 %v137, 0.01
  %v156 = vmul.f32 %v142, 0.01
  %v157 = vmul.f32 %v147, 0.01
  %v158 = vmul.f32 %v152, 0.01
  %v159 = vmax.f32 %v137, %v155
  %v160 = vmax.f32 %v142, %v156
  %v161 = vmax.f32 %v147, %v157
  %v162 = vmax.f32 %v152, %v158
  %v163 = vld [vmem:[%s3] sm:$0xff]
  %v164 = vld [vmem:[%s3 + $0x8] sm:$0xff]
  %v165 = vld [vmem:[%s4] sm:$0xff]
  %v166 = vld [vmem:[%s4 + $0x8] sm:$0xff]
  %168 = vset.pattern.permute.xlu0 0
  %169 = vperm.xlu0 %168, %v165
  %v170 = vpop.permute.xlu0 %169
  %173 = vset.pattern.permute.xlu0 0
  %174 = vperm.xlu0 %173, %v166
  %v175 = vpop.permute.xlu0 %174
  %vm177 = vcmask 261120
  %v179 = vsel %vm177, %v163, 0
  %v182 = vsel %vm177, %v164, 0
  %184 = vmatprep.subr.mxu0 0.0
  %185 = vmatpush1.msra.mxu0 0.0
  %186 = vmatprep.subr.mxu0 0.0
  %187 = vmatpush1.msra.mxu0 0.0
  %188 = vmatprep.subr.mxu0 0.0
  %189 = vmatpush1.msra.mxu0 0.0
  %190 = vmatprep.subr.mxu0 0.0
  %191 = vmatpush1.msra.mxu0 0.0
  %192 = vmatprep.subr.mxu0 0.0
  %193 = vmatpush1.msra.mxu0 0.0
  %194 = vmatprep.subr.mxu0 0.0
  %195 = vmatpush1.msra.mxu0 0.0
  %196 = vmatprep.subr.mxu0 0.0
  %197 = vmatpush1.msra.mxu0 0.0
  %198 = vmatprep.subr.mxu0 0.0
  %199 = vmatpush1.msra.mxu0 0.0
  %200 = vmatprep.subr.mxu0 0.0
  %201 = vmatpush1.msra.mxu0 0.0
  %202 = vmatprep.subr.mxu0 0.0
  %203 = vmatpush1.msra.mxu0 0.0
  %204 = vmatprep.subr.mxu0 0.0
  %205 = vmatpush1.msra.mxu0 0.0
  %206 = vmatprep.subr.mxu0 0.0
  %207 = vmatpush1.msra.mxu0 0.0
  %208 = vmatprep.subr.mxu0 0.0
  %209 = vmatpush1.msra.mxu0 %v162
  %210 = vmatprep.subr.mxu0 0.0
  %211 = vmatpush1.msra.mxu0 %v161
  %212 = vmatprep.subr.mxu0 0.0
  %213 = vmatpush1.msra.mxu0 %v160
  %214 = vmatprep.subr.mxu0 0.0
  %215 = vmatpush1.msra.mxu0 %v159
  %216 = vmatprep.subr.mxu0 0.0
  %217 = vmatpush2.msra.mxu0 0.0
  %218 = vmatprep.subr.mxu0 0.0
  %219 = vmatpush2.msra.mxu0 0.0
  %220 = vmatprep.subr.mxu0 0.0
  %221 = vmatpush2.msra.mxu0 0.0
  %222 = vmatprep.subr.mxu0 0.0
  %223 = vmatpush2.msra.mxu0 0.0
  %224 = vmatprep.subr.mxu0 0.0
  %225 = vmatpush2.msra.mxu0 0.0
  %226 = vmatprep.subr.mxu0 0.0
  %227 = vmatpush2.msra.mxu0 0.0
  %228 = vmatprep.subr.mxu0 0.0
  %229 = vmatpush2.msra.mxu0 0.0
  %230 = vmatprep.subr.mxu0 0.0
  %231 = vmatpush2.msra.mxu0 0.0
  %232 = vmatprep.subr.mxu0 0.0
  %233 = vmatpush2.msra.mxu0 0.0
  %234 = vmatprep.subr.mxu0 0.0
  %235 = vmatpush2.msra.mxu0 0.0
  %236 = vmatprep.subr.mxu0 0.0
  %237 = vmatpush2.msra.mxu0 0.0
  %238 = vmatprep.subr.mxu0 0.0
  %239 = vmatpush2.msra.mxu0 0.0
  %240 = vmatprep.subr.mxu0 0.0
  %241 = vmatpush2.msra.mxu0 0.0
  %242 = vmatprep.subr.mxu0 0.0
  %243 = vmatpush2.msra.mxu0 0.0
  %244 = vmatprep.subr.mxu0 0.0
  %245 = vmatpush2.msra.mxu0 0.0
  %246 = vmatprep.subr.mxu0 0.0
  %247 = vmatpush2.msra.mxu0 0.0
  %248 = vmatprep.mubr.f32.mxu0 0.0
  %249 = vmatmul.mubr.f32.gmra.mxu0 %v179
  %v250 = vpop.f32.mrf.mxu0
  %v251 = vadd.f32 %v170, %v250
  %v252 = vpop.f32.mrf.mxu0
  %253 = vmatprep.mubr.f32.mxu0 0.0
  %254 = vmatmul.mubr.f32.gmra.mxu0 %v182
  %v255 = vpop.f32.mrf.mxu0
  %v256 = vadd.f32 %v175, %v255
  %v257 = vpop.f32.mrf.mxu0
  %258 = vdwg.mxu0
  %v259 = vld [vmem:[%s5] sm:$0xff]
  %v260 = vmul.f32 %v256, 0.5
  %v261 = vmul.f32 %v260, 1.442695
  %v262 = vpow.pop %v261
  %v263 = vmul.f32 %v259, %v262
  %v264 = vadd.f32 %v251, %v263
  %vm265 = vcmask 15360
  %266 = vst.msk [vmem:[%s6] sm:$0xff] %vm265, %v251
  %267 = vst.msk [vmem:[%s6 + $0x8] sm:$0xff] %vm265, %v256
  %268 = vst.msk [vmem:[%s6 + $0x10] sm:$0xff] %vm265, %v264
  // Predicated region
  $region26: #{tpu_custom_call.1} parent=0 // pred_check
    _
  $region27: #{tpu_custom_call.1} parent=0 // pred_check_branch
    %270 = sbr.rel (0) target = $region29
  $region28: #{tpu_custom_call.1} parent=0 // pred_region
    _
  $region29: #{tpu_custom_call.1} parent=0 // pred_fallthru
    _
  // Predicated region
  $region30: #{tpu_custom_call.1} parent=0 // pred_check
    _
  $region31: #{tpu_custom_call.1} parent=0 // pred_check_branch
    %272 = sbr.rel (0) target = $region33
  $region32: #{tpu_custom_call.1} parent=0 // pred_region
    _
  $region33: #{tpu_custom_call.1} parent=0 // pred_fallthru
    _

</llo_original>
